<compile_context>
chip_gen: v7x
topology: tpu7x:2x2x1
jax: 0.10.0
libtpu: 0.0.40
codegen_flags: <defaults>
</compile_context>

<pallas_src>
import jax
import jax.numpy as jnp
import numpy as np
from jax import lax
from jax.experimental import pallas as pl
from jax.experimental.pallas import tpu as pltpu

N_QUBITS = 4
DEFAULT_TB = 1024   # grid-level batch tile (lanes); must be a multiple of 128
SUB = 128           # in-kernel batch sub-chunk (one 128-lane vreg column)


def decoder_kernel(feat_ref, qc_ref,
                   w1_ref, b1_ref, w2_ref, b2_ref,
                   w3_ref, b3_ref, w4_ref, b4_ref,
                   out_ref):
    """One grid step: (4, TB) features -> (1, TB) sigmoid outputs.

    The TB lanes are processed in SUB=128-lane sub-chunks inside a
    lax.fori_loop so hidden activations keep a small, bounded vreg live range
    while the grid tile stays large enough to amortize per-step overhead.
    """
    tb = feat_ref.shape[1]          # static block width
    n_sub = tb // SUB               # static trip count

    def body(c, carry):
        off = pl.multiple_of(c * SUB, SUB)
        x = feat_ref[:, pl.ds(off, SUB)]              # (4, SUB) f32
        sx = jnp.sin(x)
        cx = jnp.cos(x)

        # Folded quantum constants (precomputed host-side in init_params):
        #   y3 = A*sin(x) + B*cos(x),  z3 = C*sin(x) + D*cos(x)
        A = qc_ref[:, 0:1]
        Bq = qc_ref[:, 1:2]
        C = qc_ref[:, 2:3]
        D = qc_ref[:, 3:4]
        y3 = A * sx + Bq * cx                         # <Y>_j before CZ ring
        z3 = C * sx + D * cx                          # <Z>_j before CZ ring

        # CZ ring + PauliY readout: q_i = <Y>_i * <Z>_{i-1} * <Z>_{i+1}.
        # Static sublane shuffle (qubit index lives on sublanes, dim 4 < 8).
        z_prev = jnp.concatenate([z3[3:4, :], z3[0:3, :]], axis=0)
        z_next = jnp.concatenate([z3[1:4, :], z3[0:1, :]], axis=0)
        q = (y3 * z_prev * z_next).astype(jnp.bfloat16)   # (4, SUB)

        # ---- MLP head (Dropout(0.5) is identity at inference) ----
        # Layers 1-3 on the MXU, bf16 operands, f32 accumulation.
        h1 = jnp.maximum(
            jnp.dot(w1_ref[...], q, preferred_element_type=jnp.float32)
            + b1_ref[...], 0.0)                       # (64, SUB)
        h2 = jnp.maximum(
            jnp.dot(w2_ref[...], h1.astype(jnp.bfloat16),
                    preferred_element_type=jnp.float32)
            + b2_ref[...], 0.0)                       # (32, SUB)
        h3 = jnp.maximum(
            jnp.dot(w3_ref[...], h2.astype(jnp.bfloat16),
                    preferred_element_type=jnp.float32)
            + b3_ref[...], 0.0)                       # (4, SUB)

        # Layer 4: 4 -> 1 as multiply + sublane reduce (XLU); a 1-wide MXU
        # result is not worth the push/pop.
        logits = jnp.sum(w4_ref[...] * h3, axis=0, keepdims=True) + b4_ref[...]
        # sigmoid(x) = 0.5*tanh(0.5*x) + 0.5  (single EUP op).
        out_ref[:, pl.ds(off, SUB)] = (
            0.5 * jnp.tanh(0.5 * logits) + 0.5).astype(out_ref.dtype)
        return carry

    lax.fori_loop(0, n_sub, body, 0)


def _full_block(shape):
    # Full-array block with a constant index map: operand stays resident in
    # VMEM across all grid steps (no per-step re-DMA). Total weight footprint
    # is ~10 KB.
    return pl.BlockSpec(shape, lambda i, _n=len(shape): (0,) * _n)


def decoder_forward_lanes(feat_t, params, tb=DEFAULT_TB):
    """Core entry point. feat_t: (4, B) float32 with batch on the lane axis.

    Callers that already hold features in (4, B) layout should use this
    directly to avoid a transpose round trip through HBM.
    Returns a (1, Bp) lane-dense array (padded batch).
    """
    assert feat_t.shape[0] == N_QUBITS
    assert tb % 128 == 0, "batch tile must be a multiple of 128 (lane width)"
    B = feat_t.shape[1]
    qcoef, w1, b1, w2, b2, w3, b3, w4, b4 = params

    # Lane-dense tile, capped so medium batches still produce >= 2 grid steps
    # (v7x shards the "parallel" batch axis across its 2 TensorCores).
    TB = max(SUB, min(tb, 128 * pl.cdiv(B, 256)))
    Bp = TB * pl.cdiv(B, TB)                      # padded batch
    if Bp != B:
        feat_t = jnp.pad(feat_t, ((0, 0), (0, Bp - B)))

    out = pl.pallas_call(
        decoder_kernel,
        out_shape=jax.ShapeDtypeStruct((1, Bp), jnp.float32),
        grid_spec=pltpu.PrefetchScalarGridSpec(
            num_scalar_prefetch=0,
            grid=(Bp // TB,),
            in_specs=[
                pl.BlockSpec((N_QUBITS, TB), lambda i: (0, i)),   # features
                _full_block(qcoef.shape),
                _full_block(w1.shape), _full_block(b1.shape),
                _full_block(w2.shape), _full_block(b2.shape),
                _full_block(w3.shape), _full_block(b3.shape),
                _full_block(w4.shape), _full_block(b4.shape),
            ],
            out_specs=pl.BlockSpec((1, TB), lambda i: (0, i)),    # lane-dense
        ),
        compiler_params=pltpu.CompilerParams(
            dimension_semantics=("parallel",)),
    )(feat_t, qcoef, w1, b1, w2, b2, w3, b3, w4, b4)
    return out


def decoder_forward(features, params, tb=DEFAULT_TB):
    """PyTorch-layout wrapper: features (B, 4) float32 -> (B, 1) float32."""
    B = features.shape[0]
    feat_t = jnp.transpose(features).astype(jnp.float32)     # (4, B)
    out = decoder_forward_lanes(feat_t, params, tb=tb)
    return out[0, :B].reshape(B, 1)


def init_params(key):
    keys = jax.random.split(key, 9)
    # Quantum layer weights: shape (n_layers=1, n_qubits*3=12), uniform [0, 2pi)
    qw = jax.random.uniform(keys[0], (1, 12), jnp.float32, 0.0, 2.0 * np.pi)
    a = qw[0, 0::3]   # first RZ angle per qubit
    b = qw[0, 1::3]   # RY angle
    c = qw[0, 2::3]   # second RZ angle
    sa, ca = jnp.sin(a), jnp.cos(a)
    sb, cb = jnp.sin(b), jnp.cos(b)
    sc, cc = jnp.sin(c), jnp.cos(c)
    # Fold the constant single-qubit rotations (exact algebra):
    #   <Y>_j = (sa*cb*sc - ca*cc)*sin(x) + (sb*sc)*cos(x)
    #   <Z>_j = (-sa*sb)*sin(x) + cb*cos(x)
    qcoef = jnp.stack([sa * cb * sc - ca * cc,
                       sb * sc,
                       -sa * sb,
                       cb], axis=1).astype(jnp.float32)       # (4, 4)

    def linear(kw, kb, fan_in, fan_out):
        # PyTorch nn.Linear layout/init: weight (out, in), bias (out,).
        bound = 1.0 / np.sqrt(fan_in)
        w = jax.random.uniform(kw, (fan_out, fan_in), jnp.float32, -bound, bound)
        bias = jax.random.uniform(kb, (fan_out, 1), jnp.float32, -bound, bound)
        return w, bias

    w1, b1 = linear(keys[1], keys[2], 4, 64)     # (64, 4), (64, 1)
    w2, b2 = linear(keys[3], keys[4], 64, 32)    # (32, 64), (32, 1)
    w3, b3 = linear(keys[5], keys[6], 32, 4)     # (4, 32), (4, 1)
    w4, b4 = linear(keys[7], keys[8], 4, 1)      # (1, 4), (1, 1)
    w4c = jnp.transpose(w4)                      # (4, 1) column for sublane reduce

    kernel_params = (qcoef,
                     w1.astype(jnp.bfloat16), b1,
                     w2.astype(jnp.bfloat16), b2,
                     w3.astype(jnp.bfloat16), b3,
                     w4c, b4)
    ref_params = (a, b, c, w1, b1, w2, b2, w3, b3, w4c, b4)
    return kernel_params, ref_params


def reference_forward(features, ref_params):
    """Pure-JAX f32 reference of the original (unfolded) module math."""
    a, b, c, w1, b1, w2, b2, w3, b3, w4c, b4 = ref_params
    sa, ca = jnp.sin(a), jnp.cos(a)
    sb, cb = jnp.sin(b), jnp.cos(b)
    sc, cc = jnp.sin(c), jnp.cos(c)
    sx = jnp.sin(features)
    cx = jnp.cos(features)
    x1 = sx * sa; y1 = -sx * ca; z1 = cx
    x2 = x1 * cb + z1 * sb; z2 = -x1 * sb + z1 * cb
    y3 = x2 * sc + y1 * cc; z3 = z2
    q = y3 * jnp.roll(z3, 1, axis=1) * jnp.roll(z3, -1, axis=1)
    h = jax.nn.relu(q @ w1.T + b1.T)
    h = jax.nn.relu(h @ w2.T + b2.T)
    h = jax.nn.relu(h @ w3.T + b3.T)
    return jax.nn.sigmoid(h @ w4c + b4.T)


if __name__ == "__main__":
    key = jax.random.PRNGKey(0)
    k_feat1, k_feat2, k_params = jax.random.split(key, 3)
    kernel_params, ref_params = init_params(k_params)

    # bf16 MXU operands (f32 accumulation) => compare against the pure-f32
    # reference at ~1e-2 level rather than 2e-4.
    ATOL = RTOL = 2e-2

    # Small batch: single 128-lane tile (batch padded to 128), 1 inner chunk.
    B1 = 16
    feats1 = jax.random.uniform(k_feat1, (B1, N_QUBITS), jnp.float32, -np.pi, np.pi)
    out1 = jax.block_until_ready(decoder_forward(feats1, kernel_params))
    ref1 = reference_forward(feats1, ref_params)
    assert out1.shape == (B1, 1)
    assert np.allclose(np.asarray(out1), np.asarray(ref1), atol=ATOL, rtol=RTOL), \
        "Pallas kernel does not match JAX reference (single tile)"

    # Medium batch: multi-step grid + padded tail tile + multi-iteration
    # inner lane-chunk loop (B=600 -> TB=384, grid=(2,), 3 sub-chunks/step).
    B2 = 600
    feats2 = jax.random.uniform(k_feat2, (B2, N_QUBITS), jnp.float32, -np.pi, np.pi)
    out2 = jax.block_until_ready(decoder_forward(feats2, kernel_params))
    ref2 = reference_forward(feats2, ref_params)
    assert out2.shape == (B2, 1)
    assert np.allclose(np.asarray(out2), np.asarray(ref2), atol=ATOL, rtol=RTOL), \
        "Pallas kernel does not match JAX reference (multi-tile)"

    print("KERNEL_OK")
</pallas_src>

<mosaic_0001>
module attributes {stable_mosaic.version = 11 : i64} {
  func.func @decoder_kernel(%arg0: i32, %arg1: memref<4x128xf32, #tpu.memory_space<vmem>>, %arg2: memref<4x4xf32, #tpu.memory_space<vmem>>, %arg3: memref<64x4xbf16, #tpu.memory_space<vmem>>, %arg4: memref<64x1xf32, #tpu.memory_space<vmem>>, %arg5: memref<32x64xbf16, #tpu.memory_space<vmem>>, %arg6: memref<32x1xf32, #tpu.memory_space<vmem>>, %arg7: memref<4x32xbf16, #tpu.memory_space<vmem>>, %arg8: memref<4x1xf32, #tpu.memory_space<vmem>>, %arg9: memref<4x1xf32, #tpu.memory_space<vmem>>, %arg10: memref<1x1xf32, #tpu.memory_space<vmem>>, %arg11: memref<1x128xf32, #tpu.memory_space<vmem>>) attributes {dimension_semantics = [#tpu.dimension_semantics<parallel>], iteration_bounds = array<i64: 1>, scalar_prefetch = 0 : i64, scratch_operands = 0 : i64, tpu.core_type = #tpu.core_type<tc>, window_params = [{transform_indices = @transform_0, window_bounds = array<i64: 4, 128>}, {pipeline_mode = #tpu.pipeline_mode<synchronous>, transform_indices = @transform_1, window_bounds = array<i64: 4, 4>}, {pipeline_mode = #tpu.pipeline_mode<synchronous>, transform_indices = @transform_2, window_bounds = array<i64: 64, 4>}, {pipeline_mode = #tpu.pipeline_mode<synchronous>, transform_indices = @transform_3, window_bounds = array<i64: 64, 1>}, {pipeline_mode = #tpu.pipeline_mode<synchronous>, transform_indices = @transform_4, window_bounds = array<i64: 32, 64>}, {pipeline_mode = #tpu.pipeline_mode<synchronous>, transform_indices = @transform_5, window_bounds = array<i64: 32, 1>}, {pipeline_mode = #tpu.pipeline_mode<synchronous>, transform_indices = @transform_6, window_bounds = array<i64: 4, 32>}, {pipeline_mode = #tpu.pipeline_mode<synchronous>, transform_indices = @transform_7, window_bounds = array<i64: 4, 1>}, {pipeline_mode = #tpu.pipeline_mode<synchronous>, transform_indices = @transform_8, window_bounds = array<i64: 4, 1>}, {pipeline_mode = #tpu.pipeline_mode<synchronous>, transform_indices = @transform_9, window_bounds = array<i64: 1, 1>}, {transform_indices = @transform_10, window_bounds = array<i64: 1, 128>}]} {
    %c0_i32 = arith.constant 0 : i32
    %c128_i32 = arith.constant 128 : i32
    %0 = arith.muli %c0_i32, %c128_i32 : i32
    %1 = tpu.assume_multiple %0, 128 : i32
    %c0 = arith.constant 0 : index
    %2 = arith.index_cast %1 : i32 to index
    %3 = vector.load %arg1[%c0, %2] : memref<4x128xf32, #tpu.memory_space<vmem>>, vector<4x128xf32>
    %4 = math.sin %3 : vector<4x128xf32>
    %5 = math.cos %3 : vector<4x128xf32>
    %c0_0 = arith.constant 0 : index
    %c0_1 = arith.constant 0 : index
    %6 = vector.load %arg2[%c0_0, %c0_1] : memref<4x4xf32, #tpu.memory_space<vmem>>, vector<4x1xf32>
    %c0_2 = arith.constant 0 : index
    %c1 = arith.constant 1 : index
    %7 = vector.load %arg2[%c0_2, %c1] : memref<4x4xf32, #tpu.memory_space<vmem>>, vector<4x1xf32>
    %c0_3 = arith.constant 0 : index
    %c2 = arith.constant 2 : index
    %8 = vector.load %arg2[%c0_3, %c2] : memref<4x4xf32, #tpu.memory_space<vmem>>, vector<4x1xf32>
    %c0_4 = arith.constant 0 : index
    %c3 = arith.constant 3 : index
    %9 = vector.load %arg2[%c0_4, %c3] : memref<4x4xf32, #tpu.memory_space<vmem>>, vector<4x1xf32>
    %10 = vector.broadcast %6 : vector<4x1xf32> to vector<4x128xf32>
    %11 = arith.mulf %10, %4 : vector<4x128xf32>
    %12 = vector.broadcast %7 : vector<4x1xf32> to vector<4x128xf32>
    %13 = arith.mulf %12, %5 : vector<4x128xf32>
    %14 = arith.addf %11, %13 : vector<4x128xf32>
    %15 = vector.broadcast %8 : vector<4x1xf32> to vector<4x128xf32>
    %16 = arith.mulf %15, %4 : vector<4x128xf32>
    %17 = vector.broadcast %9 : vector<4x1xf32> to vector<4x128xf32>
    %18 = arith.mulf %17, %5 : vector<4x128xf32>
    %19 = arith.addf %16, %18 : vector<4x128xf32>
    %20 = vector.extract_strided_slice %19 {offsets = [3, 0], sizes = [1, 128], strides = [1, 1]} : vector<4x128xf32> to vector<1x128xf32>
    %21 = vector.extract_strided_slice %19 {offsets = [0, 0], sizes = [3, 128], strides = [1, 1]} : vector<4x128xf32> to vector<3x128xf32>
    %22 = tpu.concatenate %20, %21 in 0 : vector<1x128xf32>, vector<3x128xf32> -> vector<4x128xf32>
    %23 = vector.extract_strided_slice %19 {offsets = [1, 0], sizes = [3, 128], strides = [1, 1]} : vector<4x128xf32> to vector<3x128xf32>
    %24 = vector.extract_strided_slice %19 {offsets = [0, 0], sizes = [1, 128], strides = [1, 1]} : vector<4x128xf32> to vector<1x128xf32>
    %25 = tpu.concatenate %23, %24 in 0 : vector<3x128xf32>, vector<1x128xf32> -> vector<4x128xf32>
    %26 = arith.mulf %14, %22 : vector<4x128xf32>
    %27 = arith.mulf %26, %25 : vector<4x128xf32>
    %28 = arith.truncf %27 : vector<4x128xf32> to vector<4x128xbf16>
    %c0_5 = arith.constant 0 : index
    %c0_6 = arith.constant 0 : index
    %29 = vector.load %arg3[%c0_5, %c0_6] : memref<64x4xbf16, #tpu.memory_space<vmem>>, vector<64x4xbf16>
    %cst = arith.constant dense<0.000000e+00> : vector<64x128xf32>
    %30 = tpu.matmul %29, %28, %cst {dimension_numbers = #tpu.dot_dimension_numbers<[1], [0], [0], [1], [0, 0, 1, 1], [], []>} : vector<64x4xbf16>, vector<4x128xbf16>, vector<64x128xf32> -> vector<64x128xf32>
    %c0_7 = arith.constant 0 : index
    %c0_8 = arith.constant 0 : index
    %31 = vector.load %arg4[%c0_7, %c0_8] : memref<64x1xf32, #tpu.memory_space<vmem>>, vector<64x1xf32>
    %32 = vector.broadcast %31 : vector<64x1xf32> to vector<64x128xf32>
    %33 = arith.addf %30, %32 : vector<64x128xf32>
    %cst_9 = arith.constant 0.000000e+00 : f32
    %34 = vector.broadcast %cst_9 : f32 to vector<64x128xf32>
    %35 = arith.maximumf %33, %34 : vector<64x128xf32>
    %c0_10 = arith.constant 0 : index
    %c0_11 = arith.constant 0 : index
    %36 = vector.load %arg5[%c0_10, %c0_11] : memref<32x64xbf16, #tpu.memory_space<vmem>>, vector<32x64xbf16>
    %37 = arith.truncf %35 : vector<64x128xf32> to vector<64x128xbf16>
    %cst_12 = arith.constant dense<0.000000e+00> : vector<32x128xf32>
    %38 = tpu.matmul %36, %37, %cst_12 {dimension_numbers = #tpu.dot_dimension_numbers<[1], [0], [0], [1], [0, 0, 1, 1], [], []>} : vector<32x64xbf16>, vector<64x128xbf16>, vector<32x128xf32> -> vector<32x128xf32>
    %c0_13 = arith.constant 0 : index
    %c0_14 = arith.constant 0 : index
    %39 = vector.load %arg6[%c0_13, %c0_14] : memref<32x1xf32, #tpu.memory_space<vmem>>, vector<32x1xf32>
    %40 = vector.broadcast %39 : vector<32x1xf32> to vector<32x128xf32>
    %41 = arith.addf %38, %40 : vector<32x128xf32>
    %cst_15 = arith.constant 0.000000e+00 : f32
    %42 = vector.broadcast %cst_15 : f32 to vector<32x128xf32>
    %43 = arith.maximumf %41, %42 : vector<32x128xf32>
    %c0_16 = arith.constant 0 : index
    %c0_17 = arith.constant 0 : index
    %44 = vector.load %arg7[%c0_16, %c0_17] : memref<4x32xbf16, #tpu.memory_space<vmem>>, vector<4x32xbf16>
    %45 = arith.truncf %43 : vector<32x128xf32> to vector<32x128xbf16>
    %cst_18 = arith.constant dense<0.000000e+00> : vector<4x128xf32>
    %46 = tpu.matmul %44, %45, %cst_18 {dimension_numbers = #tpu.dot_dimension_numbers<[1], [0], [0], [1], [0, 0, 1, 1], [], []>} : vector<4x32xbf16>, vector<32x128xbf16>, vector<4x128xf32> -> vector<4x128xf32>
    %c0_19 = arith.constant 0 : index
    %c0_20 = arith.constant 0 : index
    %47 = vector.load %arg8[%c0_19, %c0_20] : memref<4x1xf32, #tpu.memory_space<vmem>>, vector<4x1xf32>
    %48 = vector.broadcast %47 : vector<4x1xf32> to vector<4x128xf32>
    %49 = arith.addf %46, %48 : vector<4x128xf32>
    %cst_21 = arith.constant 0.000000e+00 : f32
    %50 = vector.broadcast %cst_21 : f32 to vector<4x128xf32>
    %51 = arith.maximumf %49, %50 : vector<4x128xf32>
    %c0_22 = arith.constant 0 : index
    %c0_23 = arith.constant 0 : index
    %52 = vector.load %arg9[%c0_22, %c0_23] : memref<4x1xf32, #tpu.memory_space<vmem>>, vector<4x1xf32>
    %53 = vector.broadcast %52 : vector<4x1xf32> to vector<4x128xf32>
    %54 = arith.mulf %53, %51 : vector<4x128xf32>
    %cst_24 = arith.constant dense<0.000000e+00> : vector<128xf32>
    %55 = vector.multi_reduction <add>, %54, %cst_24 [0] : vector<4x128xf32> to vector<128xf32>
    %56 = vector.shape_cast %55 : vector<128xf32> to vector<1x128xf32>
    %c0_25 = arith.constant 0 : index
    %c0_26 = arith.constant 0 : index
    %57 = vector.load %arg10[%c0_25, %c0_26] : memref<1x1xf32, #tpu.memory_space<vmem>>, vector<1x1xf32>
    %58 = vector.broadcast %57 : vector<1x1xf32> to vector<1x128xf32>
    %59 = arith.addf %56, %58 : vector<1x128xf32>
    %cst_27 = arith.constant 5.000000e-01 : f32
    %60 = vector.broadcast %cst_27 : f32 to vector<1x128xf32>
    %61 = arith.mulf %60, %59 : vector<1x128xf32>
    %62 = math.tanh %61 : vector<1x128xf32>
    %cst_28 = arith.constant 5.000000e-01 : f32
    %63 = vector.broadcast %cst_28 : f32 to vector<1x128xf32>
    %64 = arith.mulf %63, %62 : vector<1x128xf32>
    %cst_29 = arith.constant 5.000000e-01 : f32
    %65 = vector.broadcast %cst_29 : f32 to vector<1x128xf32>
    %66 = arith.addf %64, %65 : vector<1x128xf32>
    %c0_30 = arith.constant 0 : index
    %67 = arith.index_cast %1 : i32 to index
    %68 = vector.load %arg11[%c0_30, %67] : memref<1x128xf32, #tpu.memory_space<vmem>>, vector<1x128xf32>
    tpu.vector_store %arg11[%c0_30, %67], %66 {strides = array<i32>} : memref<1x128xf32, #tpu.memory_space<vmem>>, vector<1x128xf32>,
    %c1_i32 = arith.constant 1 : i32
    return
  }
  func.func @transform_0(%arg0: i32) -> (i32, i32) {
    %c0_i32 = arith.constant 0 : i32
    %c0_i32_0 = arith.constant 0 : i32
    return %c0_i32, %arg0 : i32, i32
  }
  func.func @transform_1(%arg0: i32) -> (i32, i32) {
    %c0_i32 = arith.constant 0 : i32
    %c0_i32_0 = arith.constant 0 : i32
    %c0_i32_1 = arith.constant 0 : i32
    return %c0_i32, %c0_i32_0 : i32, i32
  }
  func.func @transform_2(%arg0: i32) -> (i32, i32) {
    %c0_i32 = arith.constant 0 : i32
    %c0_i32_0 = arith.constant 0 : i32
    %c0_i32_1 = arith.constant 0 : i32
    return %c0_i32, %c0_i32_0 : i32, i32
  }
  func.func @transform_3(%arg0: i32) -> (i32, i32) {
    %c0_i32 = arith.constant 0 : i32
    %c0_i32_0 = arith.constant 0 : i32
    %c0_i32_1 = arith.constant 0 : i32
    return %c0_i32, %c0_i32_0 : i32, i32
  }
  func.func @transform_4(%arg0: i32) -> (i32, i32) {
    %c0_i32 = arith.constant 0 : i32
    %c0_i32_0 = arith.constant 0 : i32
    %c0_i32_1 = arith.constant 0 : i32
    return %c0_i32, %c0_i32_0 : i32, i32
  }
  func.func @transform_5(%arg0: i32) -> (i32, i32) {
    %c0_i32 = arith.constant 0 : i32
    %c0_i32_0 = arith.constant 0 : i32
    %c0_i32_1 = arith.constant 0 : i32
    return %c0_i32, %c0_i32_0 : i32, i32
  }
  func.func @transform_6(%arg0: i32) -> (i32, i32) {
    %c0_i32 = arith.constant 0 : i32
    %c0_i32_0 = arith.constant 0 : i32
    %c0_i32_1 = arith.constant 0 : i32
    return %c0_i32, %c0_i32_0 : i32, i32
  }
  func.func @transform_7(%arg0: i32) -> (i32, i32) {
    %c0_i32 = arith.constant 0 : i32
    %c0_i32_0 = arith.constant 0 : i32
    %c0_i32_1 = arith.constant 0 : i32
    return %c0_i32, %c0_i32_0 : i32, i32
  }
  func.func @transform_8(%arg0: i32) -> (i32, i32) {
    %c0_i32 = arith.constant 0 : i32
    %c0_i32_0 = arith.constant 0 : i32
    %c0_i32_1 = arith.constant 0 : i32
    return %c0_i32, %c0_i32_0 : i32, i32
  }
  func.func @transform_9(%arg0: i32) -> (i32, i32) {
    %c0_i32 = arith.constant 0 : i32
    %c0_i32_0 = arith.constant 0 : i32
    %c0_i32_1 = arith.constant 0 : i32
    return %c0_i32, %c0_i32_0 : i32, i32
  }
  func.func @transform_10(%arg0: i32) -> (i32, i32) {
    %c0_i32 = arith.constant 0 : i32
    %c0_i32_0 = arith.constant 0 : i32
    return %c0_i32, %arg0 : i32, i32
  }
}

</mosaic_0001>

<llo_original>
// kernel: tpu_custom_call.1
$region0: #{tpu_custom_call.1}
  #allocation0 [shape = 'u32[]', space=smem, size = 0x4, offset = 0x4, fixed_abs, tag = 'smem constant byte address 0x4 - core index']
  #allocation1 [shape = 'u32[144,128]{1,0:T(1,128)}', space=vmem, size = 0x12000, scoped, tag = 'internal scratch']
  #allocation2 [shape = 'f32[1,1]{1,0:T(1,128)S(1)}', space=vmem, size = 0x200, scoped, tag = 'scoped memory for tpu_custom_call.1']
  %s0 = inlined_call_operand.vmem [shape: f32[4,128], index: 0, kind: input, shape index: {}]
  %s1 = inlined_call_operand.vmem [shape: f32[4,4], index: 1, kind: input, shape index: {}]
  %s2 = inlined_call_operand.vmem [shape: bf16[64,4], index: 2, kind: input, shape index: {}]
  %s3 = inlined_call_operand.vmem [shape: f32[64,1], index: 3, kind: input, shape index: {}]
  %s4 = inlined_call_operand.vmem [shape: bf16[32,64], index: 4, kind: input, shape index: {}]
  %s5 = inlined_call_operand.vmem [shape: f32[32,1], index: 5, kind: input, shape index: {}]
  %s6 = inlined_call_operand.vmem [shape: bf16[4,32], index: 6, kind: input, shape index: {}]
  %s7 = inlined_call_operand.vmem [shape: f32[4,1], index: 7, kind: input, shape index: {}]
  %s8 = inlined_call_operand.vmem [shape: f32[4,1], index: 8, kind: input, shape index: {}]
  %s9 = inlined_call_operand.<no memory space> [shape: f32[1,1], index: 9, kind: input, shape index: {}]
  %s10 = inlined_call_operand.hbm [shape: f32[1,128], index: 10, kind: output, shape index: {}]
  %s11 = sld [smem:[#allocation0]]
  $region50: #{tpu_custom_call.1} parent=0
    _
  %s13 = ssub.s32 1, %s11
  %s14 = scalar_select 0, %s13, %s11
  %v15 = vstv %s9
  %16 = vst [vmem:[#allocation2] sm:$0x1] %v15
  $region1: #{tpu_custom_call.1} parent=0
    #allocation3 [shape = 'u8[512]{0}', space=vmem, size = 0x400, scoped, tag = 'output window, operand 0, single buffered']
    #allocation4 [shape = 's32[1]{0}', space=sflag, size = 0x4, scoped, tag = 'scoped memory for tpu_custom_call.1']
    %17 = vsyncpa [#allocation4], 0
    // Predicated region
    $region2: #{tpu_custom_call.1} parent=1 // pred_check
      _
    $region3: #{tpu_custom_call.1} parent=1 // pred_check_branch
      %19 = sbr.rel (0) target = $region5
    $region4: #{tpu_custom_call.1} parent=1 // pred_region
      _
    $region5: #{tpu_custom_call.1} parent=1 // pred_fallthru
      _
    // Predicated region
    $region6: #{tpu_custom_call.1} parent=1 // pred_check
      _
    $region7: #{tpu_custom_call.1} parent=1 // pred_check_branch
      %21 = sbr.rel (0) target = $region9
    $region8: #{tpu_custom_call.1} parent=1 // pred_region
      _
    $region9: #{tpu_custom_call.1} parent=1 // pred_fallthru
      _
    // Predicated region
    $region10: #{tpu_custom_call.1} parent=1 // pred_check
      _
    $region11: #{tpu_custom_call.1} parent=1 // pred_check_branch
      %23 = sbr.rel (0) target = $region13
    $region12: #{tpu_custom_call.1} parent=1 // pred_region
      _
    $region13: #{tpu_custom_call.1} parent=1 // pred_fallthru
      _
    // Predicated region
    $region14: #{tpu_custom_call.1} parent=1 // pred_check
      _
    $region15: #{tpu_custom_call.1} parent=1 // pred_check_branch
      %25 = sbr.rel (0) target = $region17
    $region16: #{tpu_custom_call.1} parent=1 // pred_region
      _
    $region17: #{tpu_custom_call.1} parent=1 // pred_fallthru
      _
    // Predicated region
    $region18: #{tpu_custom_call.1} parent=1 // pred_check
      _
    $region19: #{tpu_custom_call.1} parent=1 // pred_check_branch
      %27 = sbr.rel (0) target = $region21
    $region20: #{tpu_custom_call.1} parent=1 // pred_region
      _
    $region21: #{tpu_custom_call.1} parent=1 // pred_fallthru
      _
    // Predicated region
    $region22: #{tpu_custom_call.1} parent=1 // pred_check
      _
    $region23: #{tpu_custom_call.1} parent=1 // pred_check_branch
      %29 = sbr.rel (0) target = $region25
    $region24: #{tpu_custom_call.1} parent=1 // pred_region
      _
    $region25: #{tpu_custom_call.1} parent=1 // pred_fallthru
      _
    // Predicated region
    $region26: #{tpu_custom_call.1} parent=1 // pred_check
      _
    $region27: #{tpu_custom_call.1} parent=1 // pred_check_branch
      %31 = sbr.rel (0) target = $region29
    $region28: #{tpu_custom_call.1} parent=1 // pred_region
      _
    $region29: #{tpu_custom_call.1} parent=1 // pred_fallthru
      _
    // Predicated region
    $region30: #{tpu_custom_call.1} parent=1 // pred_check
      _
    $region31: #{tpu_custom_call.1} parent=1 // pred_check_branch
      %33 = sbr.rel (0) target = $region33
    $region32: #{tpu_custom_call.1} parent=1 // pred_region
      _
    $region33: #{tpu_custom_call.1} parent=1 // pred_fallthru
      _
    // Predicated region
    $region34: #{tpu_custom_call.1} parent=1 // pred_check
      _
    $region35: #{tpu_custom_call.1} parent=1 // pred_check_branch
      %35 = sbr.rel (0) target = $region37
    $region36: #{tpu_custom_call.1} parent=1 // pred_region
      _
    $region37: #{tpu_custom_call.1} parent=1 // pred_fallthru
      _
    // Predicated region
    $region38: #{tpu_custom_call.1} parent=1 // pred_check
      _
    $region39: #{tpu_custom_call.1} parent=1 // pred_check_branch
      %37 = sbr.rel (0) target = $region41
    $region40: #{tpu_custom_call.1} parent=1 // pred_region
      _
    $region41: #{tpu_custom_call.1} parent=1 // pred_fallthru
      _
    %v39 = vld [vmem:[%s0] sm:$0xf]
    %v40 = vand.u32 2147483647, %v39
    %vm41 = vcmp.le.f32.partialorder %v40, 0.7853982
    %vm42 = vcmp.lt.s32.totalorder %v39, 0
    %v43 = vand.u32 %v39, 2139095040
    %v44 = vshrl.u32 %v43, 23
    %v45 = vsub.s32 %v44, 127
    %v46 = vand.u32 2147483647, %v39
    %v47 = vand.u32 %v46, 8388607
    %v48 = vor.u32 %v47, 8388608
    %v49 = vsub.s32 0, %v48
    %v50 = vadd.s32 %v45, 1
    %vm51 = vcmp.gt.s32.totalorder %v50, 0
    %v52 = vsel %vm51, %v50, 0
    %v53 = vshrl.u32 %v52, 5
    %v54 = vand.u32 %v52, 31
    %v55 = vsub.s32 32, %v54
    %v56 = vshrl.u32 683565275, %v55
    %v57 = vshll.u32 683565275, %v54
    %v58 = vshrl.u32 2475754826, %v55
    %v59 = vor.u32 %v57, %v58
    %v60 = vshll.u32 2475754826, %v54
    %v61 = vshrl.u32 2131351028, %v55
    %v62 = vor.u32 %v60, %v61
    %v63 = vshll.u32 2131351028, %v54
    %v64 = vshrl.u32 2102212464, %v55
    %v65 = vor.u32 %v63, %v64
    %v66 = vshll.u32 2102212464, %v54
    %v67 = vshrl.u32 920167782, %v55
    %v68 = vor.u32 %v66, %v67
    %v69 = vshll.u32 920167782, %v54
    %v70 = vshrl.u32 1326507024, %v55
    %v71 = vor.u32 %v69, %v70
    %vm72 = vcmp.lt.s32.totalorder %v53, 1
    %vm73 = vcmp.lt.s32.totalorder %v53, 2
    %vm74 = vcmp.lt.s32.totalorder %v53, 3
    %vm75 = vcmp.lt.s32.totalorder %v53, 4
    %v76 = vsel %vm72, %v56, %v59
    %v77 = vsel %vm75, %v65, 2102212464
    %v78 = vsel %vm74, %v62, %v77
    %v79 = vsel %vm73, %v76, %v78
    %v80 = vsel %vm72, %v59, %v62
    %v81 = vsel %vm75, %v68, 920167782
    %v82 = vsel %vm74, %v65, %v81
    %v83 = vsel %vm73, %v80, %v82
    %v84 = vsel %vm72, %v62, %v65
    %v85 = vsel %vm75, %v71, 1326507024
    %v86 = vsel %vm74, %v68, %v85
    %v87 = vsel %vm73, %v84, %v86
    %v88 = vshll.u32 %v48, 8
    %v89 = vmul.u32.u64.compose %v88, %v87
    %v90 = vextract.low.u32 %v89
    %v91 = vextract.high.u32 %v89
    %v92 = vmul.u32.u64.compose %v88, %v83
    %v93 = vextract.low.u32 %v92
    %v94 = vextract.high.u32 %v92
    %v95 = vmul.u32 %v88, %v79
    %v96 = vadd.s32 %v91, %v93
    %vm97 = vc.u32 %v91, %v93
    %v98 = vadd.s32 %v94, 1
    %v99 = vsel %vm97, %v98, %v94
    %v100 = vadd.s32 %v95, %v99
    %v101 = vadd.s32 %v100, 536870912
    %v102 = vshrl.u32 %v101, 30
    %v103 = vshll.u32 %v102, 30
    %v104 = vsub.s32 %v100, %v103
    %vm105 = vcmp.lt.s32.totalorder %v104, 0
    %v106 = vsub.s32 0, %v104
    %v107 = vsel %vm105, %v106, %v104
    %v108 = vclz %v107
    %v109 = vsub.s32 %v108, 2
    %vm110 = vcmp.gt.s32.totalorder 0, %v109
    %v111 = vsel %vm110, 0, %v109
    %v112 = vsub.s32 32, %v111
    %v113 = vshll.u32 %v104, %v111
    %v114 = vshrl.u32 %v96, %v112
    %v115 = vor.u32 %v113, %v114
    %v116 = vsub.s32 4294967266, %v111
    %v117 = vadd.s32 %v116, 127
    %v118 = vshll.u32 %v117, 23
    %v119 = vor.u32 4788187, %v118
    %v120 = vand.u32 2147483647, %v119
    %v122 = vcvt.s32.f32 %v115
    %v123 = vmul.f32 %v122, %v120
    %v124 = vxor.u32 %v123, 2147483648
    %v125 = vsel %vm42, %v124, %v123
    %v126 = vsub.s32 4, %v102
    %v127 = vsel %vm42, %v126, %v102
    %v128 = vsel %vm41, %v39, %v125
    %v129 = vsel %vm41, 0, %v127
    %v130 = vcosq.f32.pop %v128
    %v131 = vsinq.f32.pop %v128
    %vm132 = vweird.f32 %v39
    %v133 = vadd.s32 %v129, 3
    %v134 = vand.u32 %v133, 3
    %vm135 = vcmp.lt.s32.totalorder %v134, 2
    %vm136 = vcmp.eq.s32.totalorder %v134, 0
    %v137 = vxor.u32 %v131, 2147483648
    %v138 = vsel %vm136, %v130, %v137
    %vm139 = vcmp.eq.s32.totalorder %v134, 2
    %v140 = vxor.u32 %v130, 2147483648
    %v141 = vsel %vm139, %v140, %v131
    %v142 = vsel %vm135, %v138, %v141
    %v143 = vsel %vm132, nan, %v142
    %v144 = vand.u32 2147483647, %v39
    %vm145 = vcmp.le.f32.partialorder %v144, 0.7853982
    %vm146 = vcmp.lt.s32.totalorder %v39, 0
    %v147 = vand.u32 %v39, 2139095040
    %v148 = vshrl.u32 %v147, 23
    %v149 = vsub.s32 %v148, 127
    %v150 = vand.u32 2147483647, %v39
    %v151 = vand.u32 %v150, 8388607
    %v152 = vor.u32 %v151, 8388608
    %v153 = vsub.s32 0, %v152
    %v154 = vadd.s32 %v149, 1
    %vm155 = vcmp.gt.s32.totalorder %v154, 0
    %v156 = vsel %vm155, %v154, 0
    %v157 = vshrl.u32 %v156, 5
    %v158 = vand.u32 %v156, 31
    %v159 = vsub.s32 32, %v158
    %v160 = vshrl.u32 683565275, %v159
    %v161 = vshll.u32 683565275, %v158
    %v162 = vshrl.u32 2475754826, %v159
    %v163 = vor.u32 %v161, %v162
    %v164 = vshll.u32 2475754826, %v158
    %v165 = vshrl.u32 2131351028, %v159
    %v166 = vor.u32 %v164, %v165
    %v167 = vshll.u32 2131351028, %v158
    %v168 = vshrl.u32 2102212464, %v159
    %v169 = vor.u32 %v167, %v168
    %v170 = vshll.u32 2102212464, %v158
    %v171 = vshrl.u32 920167782, %v159
    %v172 = vor.u32 %v170, %v171
    %v173 = vshll.u32 920167782, %v158
    %v174 = vshrl.u32 1326507024, %v159
    %v175 = vor.u32 %v173, %v174
    %vm176 = vcmp.lt.s32.totalorder %v157, 1
    %vm177 = vcmp.lt.s32.totalorder %v157, 2
    %vm178 = vcmp.lt.s32.totalorder %v157, 3
    %vm179 = vcmp.lt.s32.totalorder %v157, 4
    %v180 = vsel %vm176, %v160, %v163
    %v181 = vsel %vm179, %v169, 2102212464
    %v182 = vsel %vm178, %v166, %v181
    %v183 = vsel %vm177, %v180, %v182
    %v184 = vsel %vm176, %v163, %v166
    %v185 = vsel %vm179, %v172, 920167782
    %v186 = vsel %vm178, %v169, %v185
    %v187 = vsel %vm177, %v184, %v186
    %v188 = vsel %vm176, %v166, %v169
    %v189 = vsel %vm179, %v175, 1326507024
    %v190 = vsel %vm178, %v172, %v189
    %v191 = vsel %vm177, %v188, %v190
    %v192 = vshll.u32 %v152, 8
    %v193 = vmul.u32.u64.compose %v192, %v191
    %v194 = vextract.low.u32 %v193
    %v195 = vextract.high.u32 %v193
    %v196 = vmul.u32.u64.compose %v192, %v187
    %v197 = vextract.low.u32 %v196
    %v198 = vextract.high.u32 %v196
    %v199 = vmul.u32 %v192, %v183
    %v200 = vadd.s32 %v195, %v197
    %vm201 = vc.u32 %v195, %v197
    %v202 = vadd.s32 %v198, 1
    %v203 = vsel %vm201, %v202, %v198
    %v204 = vadd.s32 %v199, %v203
    %v205 = vadd.s32 %v204, 536870912
    %v206 = vshrl.u32 %v205, 30
    %v207 = vshll.u32 %v206, 30
    %v208 = vsub.s32 %v204, %v207
    %vm209 = vcmp.lt.s32.totalorder %v208, 0
    %v210 = vsub.s32 0, %v208
    %v211 = vsel %vm209, %v210, %v208
    %v212 = vclz %v211
    %v213 = vsub.s32 %v212, 2
    %vm214 = vcmp.gt.s32.totalorder 0, %v213
    %v215 = vsel %vm214, 0, %v213
    %v216 = vsub.s32 32, %v215
    %v217 = vshll.u32 %v208, %v215
    %v218 = vshrl.u32 %v200, %v216
    %v219 = vor.u32 %v217, %v218
    %v220 = vsub.s32 4294967266, %v215
    %v221 = vadd.s32 %v220, 127
    %v222 = vshll.u32 %v221, 23
    %v223 = vor.u32 4788187, %v222
    %v224 = vand.u32 2147483647, %v223
    %v226 = vcvt.s32.f32 %v219
    %v227 = vmul.f32 %v226, %v224
    %v228 = vxor.u32 %v227, 2147483648
    %v229 = vsel %vm146, %v228, %v227
    %v230 = vsub.s32 4, %v206
    %v231 = vsel %vm146, %v230, %v206
    %v232 = vsel %vm145, %v39, %v229
    %v233 = vsel %vm145, 0, %v231
    %v234 = vcosq.f32.pop %v232
    %v235 = vsinq.f32.pop %v232
    %vm236 = vweird.f32 %v39
    %v237 = vand.u32 %v233, 3
    %vm238 = vcmp.lt.s32.totalorder %v237, 2
    %vm239 = vcmp.eq.s32.totalorder %v237, 0
    %v240 = vxor.u32 %v235, 2147483648
    %v241 = vsel %vm239, %v234, %v240
    %vm242 = vcmp.eq.s32.totalorder %v237, 2
    %v243 = vxor.u32 %v234, 2147483648
    %v244 = vsel %vm242, %v243, %v235
    %v245 = vsel %vm238, %v241, %v244
    %v246 = vsel %vm236, nan, %v245
    %v247 = vld [vmem:[%s1] sm:$0xf]
    %249 = vset.pattern.permute.xlu0 0
    %250 = vperm.xlu0 %249, %v247
    %v251 = vpop.permute.xlu0 %250
    %v253 = vmul.f32 %v251, %v143
    %254 = vset.pattern.permute.xlu0 1
    %255 = vperm.xlu0 %254, %v247
    %v256 = vpop.permute.xlu0 %255
    %v258 = vmul.f32 %v256, %v246
    %v259 = vadd.f32 %v253, %v258
    %260 = vset.pattern.permute.xlu0 2
    %261 = vperm.xlu0 %260, %v247
    %v262 = vpop.permute.xlu0 %261
    %v264 = vmul.f32 %v262, %v143
    %265 = vset.pattern.permute.xlu0 3
    %266 = vperm.xlu0 %265, %v247
    %v267 = vpop.permute.xlu0 %266
    %v269 = vmul.f32 %v267, %v246
    %v270 = vadd.f32 %v264, %v269
    %v272 = vrot.slane %v270, 3
    %v274 = vrot.slane %v270, 7
    %vm276 = vcmask 1040384
    %v277 = vsel %vm276, %v272, %v274
    %v278 = vrot.slane %v270, 1
    %v280 = vrot.slane %v270, 5
    %vm282 = vcmask 1042432
    %v283 = vsel %vm282, %v278, %v280
    %v284 = vmul.f32 %v259, %v277
    %v285 = vmul.f32 %v284, %v283
    %v286 = vpack.c.bf16 %v285, %v285
    %v287 = vld [vmem:[%s2] sm:$0xf]
    %v288 = vld [vmem:[%s2 + $0x4] sm:$0xf]
    %v289 = vld [vmem:[%s2 + $0x8] sm:$0xf]
    %v290 = vld [vmem:[%s2 + $0xc] sm:$0xf]
    %v291 = vld [vmem:[%s2 + $0x10] sm:$0xf]
    %v292 = vld [vmem:[%s2 + $0x14] sm:$0xf]
    %v293 = vld [vmem:[%s2 + $0x18] sm:$0xf]
    %v294 = vld [vmem:[%s2 + $0x1c] sm:$0xf]
    %v295 = vld [vmem:[%s3] sm:$0xff]
    %v296 = vld [vmem:[%s3 + $0x8] sm:$0xff]
    %v297 = vld [vmem:[%s3 + $0x10] sm:$0xff]
    %v298 = vld [vmem:[%s3 + $0x18] sm:$0xff]
    %v299 = vld [vmem:[%s3 + $0x20] sm:$0xff]
    %v300 = vld [vmem:[%s3 + $0x28] sm:$0xff]
    %v301 = vld [vmem:[%s3 + $0x30] sm:$0xff]
    %v302 = vld [vmem:[%s3 + $0x38] sm:$0xff]
    %304 = vset.pattern.permute.xlu0 0
    %305 = vperm.xlu0 %304, %v295
    %v306 = vpop.permute.xlu0 %305
    %309 = vset.pattern.permute.xlu0 0
    %310 = vperm.xlu0 %309, %v296
    %v311 = vpop.permute.xlu0 %310
    %314 = vset.pattern.permute.xlu0 0
    %315 = vperm.xlu0 %314, %v297
    %v316 = vpop.permute.xlu0 %315
    %319 = vset.pattern.permute.xlu0 0
    %320 = vperm.xlu0 %319, %v298
    %v321 = vpop.permute.xlu0 %320
    %324 = vset.pattern.permute.xlu0 0
    %325 = vperm.xlu0 %324, %v299
    %v326 = vpop.permute.xlu0 %325
    %329 = vset.pattern.permute.xlu0 0
    %330 = vperm.xlu0 %329, %v300
    %v331 = vpop.permute.xlu0 %330
    %334 = vset.pattern.permute.xlu0 0
    %335 = vperm.xlu0 %334, %v301
    %v336 = vpop.permute.xlu0 %335
    %339 = vset.pattern.permute.xlu0 0
    %340 = vperm.xlu0 %339, %v302
    %v341 = vpop.permute.xlu0 %340
    %v351 = vunpack.c.l.b16 %v287
    %v352 = vunpack.c.l.b16 %v288
    %v353 = vunpack.c.l.b16 %v289
    %v354 = vunpack.c.l.b16 %v290
    %v355 = vunpack.c.l.b16 %v291
    %v356 = vunpack.c.l.b16 %v292
    %v357 = vunpack.c.l.b16 %v293
    %v358 = vunpack.c.l.b16 %v294
    %v359 = vpack.c.b16 %v352, %v351
    %v360 = vpack.c.b16 %v354, %v353
    %v361 = vpack.c.b16 %v356, %v355
    %v362 = vpack.c.b16 %v358, %v357
    %vm363 = vcmask 31744
    %v365 = vsel %vm363, %v359, 0
    %v368 = vsel %vm363, %v360, 0
    %v371 = vsel %vm363, %v361, 0
    %v374 = vsel %vm363, %v362, 0
    %vm376 = vcmask 1041408
    %v378 = vsel %vm376, %v286, 0
    %380 = vmatprep.subr.bf16.mxu0 0
    %381 = vmatpush1.bf16.msra.mxu0 %v378
    %382 = vmatprep.subr.bf16.mxu0 0
    %383 = vmatpush1.bf16.msra.mxu0 0
    %384 = vmatprep.subr.bf16.mxu0 0
    %385 = vmatpush1.bf16.msra.mxu0 0
    %386 = vmatprep.subr.bf16.mxu0 0
    %387 = vmatpush1.bf16.msra.mxu0 0
    %388 = vmatprep.subr.bf16.mxu0 0
    %389 = vmatpush1.bf16.msra.mxu0 0
    %390 = vmatprep.subr.bf16.mxu0 0
    %391 = vmatpush1.bf16.msra.mxu0 0
    %392 = vmatprep.subr.bf16.mxu0 0
    %393 = vmatpush1.bf16.msra.mxu0 0
    %394 = vmatprep.subr.bf16.mxu0 0
    %395 = vmatpush1.bf16.msra.mxu0 0
    %396 = vmatprep.subr.bf16.mxu0 0
    %397 = vmatpush1.bf16.msra.mxu0 0
    %398 = vmatprep.subr.bf16.mxu0 0
    %399 = vmatpush1.bf16.msra.mxu0 0
    %400 = vmatprep.subr.bf16.mxu0 0
    %401 = vmatpush1.bf16.msra.mxu0 0
    %402 = vmatprep.subr.bf16.mxu0 0
    %403 = vmatpush1.bf16.msra.mxu0 0
    %404 = vmatprep.subr.bf16.mxu0 0
    %405 = vmatpush1.bf16.msra.mxu0 0
    %406 = vmatprep.subr.bf16.mxu0 0
    %407 = vmatpush1.bf16.msra.mxu0 0
    %408 = vmatprep.subr.bf16.mxu0 0
    %409 = vmatpush1.bf16.msra.mxu0 0
    %410 = vmatprep.subr.bf16.mxu0 0
    %411 = vmatpush1.bf16.msra.mxu0 0
    %412 = vmatprep.mubr.bf16.mxu0 0
    %413 = vmatmul.mubr.bf16.gmra.mrb[0].mxu0 %v365
    %v414 = vpop.f32.mrb[0].mxu0
    %v415 = vadd.f32 %v306, %v414
    %v416 = vpop.f32.mrb[0].mxu0
    %v417 = vpop.f32.mrb[0].mxu0
    %v418 = vadd.f32 %v311, %v417
    %v419 = vpop.f32.mrb[0].mxu0
    %420 = vmatprep.mubr.bf16.mxu0 0
    %421 = vmatmul.mubr.bf16.gmra.mrb[0].mxu0 %v368
    %v422 = vpop.f32.mrb[0].mxu0
    %v423 = vadd.f32 %v316, %v422
    %v424 = vpop.f32.mrb[0].mxu0
    %v425 = vpop.f32.mrb[0].mxu0
    %v426 = vadd.f32 %v321, %v425
    %v427 = vpop.f32.mrb[0].mxu0
    %428 = vmatprep.mubr.bf16.mxu0 0
    %429 = vmatmul.mubr.bf16.gmra.mrb[0].mxu0 %v371
    %v430 = vpop.f32.mrb[0].mxu0
    %v431 = vadd.f32 %v326, %v430
    %v432 = vpop.f32.mrb[0].mxu0
    %v433 = vpop.f32.mrb[0].mxu0
    %v434 = vadd.f32 %v331, %v433
    %v435 = vpop.f32.mrb[0].mxu0
    %436 = vmatprep.mubr.bf16.mxu0 0
    %437 = vmatmul.mubr.bf16.gmra.mrb[0].mxu0 %v374
    %v438 = vpop.f32.mrb[0].mxu0
    %v439 = vadd.f32 %v336, %v438
    %v440 = vpop.f32.mrb[0].mxu0
    %v441 = vpop.f32.mrb[0].mxu0
    %v442 = vadd.f32 %v341, %v441
    %v443 = vpop.f32.mrb[0].mxu0
    %444 = vdwg.mxu0
    %v445 = vmax.f32 %v415, 0.0
    %v446 = vmax.f32 %v418, 0.0
    %v447 = vmax.f32 %v423, 0.0
    %v448 = vmax.f32 %v426, 0.0
    %v449 = vmax.f32 %v431, 0.0
    %v450 = vmax.f32 %v434, 0.0
    %v451 = vmax.f32 %v439, 0.0
    %v452 = vmax.f32 %v442, 0.0
    %v453 = vld [vmem:[%s4] sm:$0xf]
    %v454 = vld [vmem:[%s4 + $0x4] sm:$0xf]
    %v455 = vld [vmem:[%s4 + $0x8] sm:$0xf]
    %v456 = vld [vmem:[%s4 + $0xc] sm:$0xf]
    %v457 = vpack.c.bf16 %v446, %v445
    %v458 = vpack.c.bf16 %v448, %v447
    %v459 = vpack.c.bf16 %v450, %v449
    %v460 = vpack.c.bf16 %v452, %v451
    %v461 = vld [vmem:[%s5] sm:$0xff]
    %v462 = vld [vmem:[%s5 + $0x8] sm:$0xff]
    %v463 = vld [vmem:[%s5 + $0x10] sm:$0xff]
    %v464 = vld [vmem:[%s5 + $0x18] sm:$0xff]
    %466 = vset.pattern.permute.xlu0 0
    %467 = vperm.xlu0 %466, %v461
    %v468 = vpop.permute.xlu0 %467
    %471 = vset.pattern.permute.xlu0 0
    %472 = vperm.xlu0 %471, %v462
    %v473 = vpop.permute.xlu0 %472
    %476 = vset.pattern.permute.xlu0 0
    %477 = vperm.xlu0 %476, %v463
    %v478 = vpop.permute.xlu0 %477
    %481 = vset.pattern.permute.xlu0 0
    %482 = vperm.xlu0 %481, %v464
    %v483 = vpop.permute.xlu0 %482
    %v489 = vunpack.c.l.b16 %v453
    %v490 = vunpack.c.l.b16 %v454
    %v491 = vunpack.c.l.b16 %v455
    %v492 = vunpack.c.l.b16 %v456
    %v493 = vpack.c.b16 %v490, %v489
    %v494 = vpack.c.b16 %v492, %v491
    %vm495 = vcmask 523264
    %v497 = vsel %vm495, %v493, 0
    %v500 = vsel %vm495, %v494, 0
    %502 = vmatprep.subr.bf16.mxu0 0
    %503 = vmatpush1.bf16.msra.mxu0 %v457
    %504 = vmatprep.subr.bf16.mxu0 0
    %505 = vmatpush1.bf16.msra.mxu0 %v458
    %506 = vmatprep.subr.bf16.mxu0 0
    %507 = vmatpush1.bf16.msra.mxu0 %v459
    %508 = vmatprep.subr.bf16.mxu0 0
    %509 = vmatpush1.bf16.msra.mxu0 %v460
    %510 = vmatprep.subr.bf16.mxu0 0
    %511 = vmatpush1.bf16.msra.mxu0 0
    %512 = vmatprep.subr.bf16.mxu0 0
    %513 = vmatpush1.bf16.msra.mxu0 0
    %514 = vmatprep.subr.bf16.mxu0 0
    %515 = vmatpush1.bf16.msra.mxu0 0
    %516 = vmatprep.subr.bf16.mxu0 0
    %517 = vmatpush1.bf16.msra.mxu0 0
    %518 = vmatprep.subr.bf16.mxu0 0
    %519 = vmatpush1.bf16.msra.mxu0 0
    %520 = vmatprep.subr.bf16.mxu0 0
    %521 = vmatpush1.bf16.msra.mxu0 0
    %522 = vmatprep.subr.bf16.mxu0 0
    %523 = vmatpush1.bf16.msra.mxu0 0
    %524 = vmatprep.subr.bf16.mxu0 0
    %525 = vmatpush1.bf16.msra.mxu0 0
    %526 = vmatprep.subr.bf16.mxu0 0
    %527 = vmatpush1.bf16.msra.mxu0 0
    %528 = vmatprep.subr.bf16.mxu0 0
    %529 = vmatpush1.bf16.msra.mxu0 0
    %530 = vmatprep.subr.bf16.mxu0 0
    %531 = vmatpush1.bf16.msra.mxu0 0
    %532 = vmatprep.subr.bf16.mxu0 0
    %533 = vmatpush1.bf16.msra.mxu0 0
    %534 = vmatprep.mubr.bf16.mxu0 0
    %535 = vmatmul.mubr.bf16.gmra.mrb[0].mxu0 %v497
    %v536 = vpop.f32.mrb[0].mxu0
    %v537 = vadd.f32 %v468, %v536
    %v538 = vpop.f32.mrb[0].mxu0
    %v539 = vpop.f32.mrb[0].mxu0
    %v540 = vadd.f32 %v473, %v539
    %v541 = vpop.f32.mrb[0].mxu0
    %542 = vmatprep.mubr.bf16.mxu0 0
    %543 = vmatmul.mubr.bf16.gmra.mrb[0].mxu0 %v500
    %v544 = vpop.f32.mrb[0].mxu0
    %v545 = vadd.f32 %v478, %v544
    %v546 = vpop.f32.mrb[0].mxu0
    %v547 = vpop.f32.mrb[0].mxu0
    %v548 = vadd.f32 %v483, %v547
    %v549 = vpop.f32.mrb[0].mxu0
    %550 = vdwg.mxu0
    %v551 = vmax.f32 %v537, 0.0
    %v552 = vmax.f32 %v540, 0.0
    %v553 = vmax.f32 %v545, 0.0
    %v554 = vmax.f32 %v548, 0.0
    %v555 = vld [vmem:[%s6] sm:$0x3]
    %v556 = vpack.c.bf16 %v552, %v551
    %v557 = vpack.c.bf16 %v554, %v553
    %v558 = vld [vmem:[%s7] sm:$0xf]
    %560 = vset.pattern.permute.xlu0 0
    %561 = vperm.xlu0 %560, %v558
    %v562 = vpop.permute.xlu0 %561
    %vm564 = vcmask 261120
    %v566 = vsel %vm564, %v555, 0
    %568 = vmatprep.subr.bf16.mxu0 0
    %569 = vmatpush1.bf16.msra.mxu0 %v556
    %570 = vmatprep.subr.bf16.mxu0 0
    %571 = vmatpush1.bf16.msra.mxu0 %v557
    %572 = vmatprep.subr.bf16.mxu0 0
    %573 = vmatpush1.bf16.msra.mxu0 0
    %574 = vmatprep.subr.bf16.mxu0 0
    %575 = vmatpush1.bf16.msra.mxu0 0
    %576 = vmatprep.subr.bf16.mxu0 0
    %577 = vmatpush1.bf16.msra.mxu0 0
    %578 = vmatprep.subr.bf16.mxu0 0
    %579 = vmatpush1.bf16.msra.mxu0 0
    %580 = vmatprep.subr.bf16.mxu0 0
    %581 = vmatpush1.bf16.msra.mxu0 0
    %582 = vmatprep.subr.bf16.mxu0 0
    %583 = vmatpush1.bf16.msra.mxu0 0
    %584 = vmatprep.subr.bf16.mxu0 0
    %585 = vmatpush1.bf16.msra.mxu0 0
    %586 = vmatprep.subr.bf16.mxu0 0
    %587 = vmatpush1.bf16.msra.mxu0 0
    %588 = vmatprep.subr.bf16.mxu0 0
    %589 = vmatpush1.bf16.msra.mxu0 0
    %590 = vmatprep.subr.bf16.mxu0 0
    %591 = vmatpush1.bf16.msra.mxu0 0
    %592 = vmatprep.subr.bf16.mxu0 0
    %593 = vmatpush1.bf16.msra.mxu0 0
    %594 = vmatprep.subr.bf16.mxu0 0
    %595 = vmatpush1.bf16.msra.mxu0 0
    %596 = vmatprep.subr.bf16.mxu0 0
    %597 = vmatpush1.bf16.msra.mxu0 0
    %598 = vmatprep.subr.bf16.mxu0 0
    %599 = vmatpush1.bf16.msra.mxu0 0
    %600 = vmatprep.mubr.bf16.mxu0 0
    %601 = vmatmul.mubr.bf16.gmra.mrb[0].mxu0 %v566
    %v602 = vpop.f32.mrb[0].mxu0
    %v603 = vadd.f32 %v562, %v602
    %v604 = vpop.f32.mrb[0].mxu0
    %v605 = vpop.f32.mrb[0].mxu0
    %v606 = vpop.f32.mrb[0].mxu0
    %607 = vdwg.mxu0
    %v608 = vmax.f32 %v603, 0.0
    %v609 = vld [vmem:[%s8] sm:$0xf]
    %611 = vset.pattern.permute.xlu0 0
    %612 = vperm.xlu0 %611, %v609
    %v613 = vpop.permute.xlu0 %612
    %v615 = vmul.f32 %v613, %v608
    %vm616 = vcmask 1043456
    %v617 = vsel %vm616, %v615, 0.0
    %v618 = vrot.slane %v617, 4
    %v619 = vadd.f32 %v617, %v618
    %v620 = vrot.slane %v619, 2
    %v621 = vadd.f32 %v619, %v620
    %v622 = vrot.slane %v621, 1
    %v623 = vadd.f32 %v621, %v622
    %v624 = vld [vmem:[#allocation2] sm:$0x1]
    %626 = vset.pattern.permute.xlu0 0
    %627 = vperm.xlu0 %626, %v624
    %v628 = vpop.permute.xlu0 %627
    %v630 = vlaneseq
    %v631 = vshrl.u32 %v630, 7
    %v632 = vsub.s32 0, %v631
    %v633 = vrot.slane %v628, %v632
    %v634 = vadd.f32 %v623, %v633
    %v635 = vmul.f32 %v634, 0.5
    %v636 = vtanh.pop %v635
    %v637 = vmul.f32 %v636, 0.5
    %v638 = vadd.f32 %v637, 0.5
    %639 = vst [vmem:[#allocation3] sm:$0x1] %v638
    // Predicated region
    $region42: #{tpu_custom_call.1} parent=1 // pred_check
      _
    $region43: #{tpu_custom_call.1} parent=1 // pred_check_branch
      %641 = sbr.rel (0) target = $region45
    $region44: #{tpu_custom_call.1} parent=1 // pred_region
      %s643 = ssub.s32 16, 16
      %644 = vsyncadd [#allocation4], %s643
      %s646 = sshll.u32 [#allocation3], 4
      %s647 = int_to_ptr.vmem [resolvable:$true] %s646
      %649 = dma.vmem_to_hbm [thread:$0]  %s647, 16, %s10, [#allocation4]
    $region45: #{tpu_custom_call.1} parent=1 // pred_fallthru
      _
    // Predicated region
    $region46: #{tpu_custom_call.1} parent=1 // pred_check
      _
    $region47: #{tpu_custom_call.1} parent=1 // pred_check_branch
      %651 = sbr.rel (0) target = $region49
    $region48: #{tpu_custom_call.1} parent=1 // pred_region
      %652 = dma.done [#allocation4], 16
    $region49: #{tpu_custom_call.1} parent=1 // pred_fallthru
      _
    %653 = vsyncpa [#allocation4], 1

</llo_original>
